<compile_context>
chip_gen: v7x
topology: tpu7x:2x2x1
jax: 0.10.0
libtpu: 0.0.40
codegen_flags: <defaults>
</compile_context>

<pallas_src>
import math

import jax
import jax.numpy as jnp
from jax.experimental import pallas as pl
from jax.experimental.pallas import tpu as pltpu


def _choose_tiling(n, target_tile=4096):
    """Pick (tile_n, n_pad): lane-aligned tiles, tile_n | n_pad, n_pad >= n.
    Keeps grid >= 2 whenever n spans more than one 128-lane group (v7x megacore)."""
    n_lane = max(128, ((n + 127) // 128) * 128)
    tile = min(int(target_tile), n_lane)
    if n_lane >= 256:
        tile = min(tile, max(128, (n_lane // 2) // 128 * 128))
    n_pad = ((n_lane + tile - 1) // tile) * tile
    return tile, n_pad


def make_concrete_kernel(temp: float, num_cats: int):
    """Builds the Pallas kernel body; baked-in scalars are Python floats."""
    temp = float(temp)
    inv_temp = 1.0 / temp
    kf = float(num_cats)
    eps = float(jnp.finfo(jnp.float32).eps)   # matches torch clamp_probs

    def concrete_kernel(logits_ref, u_ref, sample_ref, lp_ref):
        logits = logits_ref[...]                        # (C, T) resident, full-lane
        u = jnp.clip(u_ref[...], eps, 1.0 - eps)        # (C, T) clamp_probs

        # ---- rsample (reparameterized Gumbel-Softmax) --------------------
        nlu = -jnp.log(u)                               # -log u  (> 0)
        g = -jnp.log(nlu)                               # Gumbel(0,1) noise
        scores = (logits + g) * inv_temp                # (C, T), mul not div
        m = jnp.max(scores, axis=0, keepdims=True)      # (1, T) sublane reduce
        e = jnp.exp(scores - m)                         # (C, T) single exp
        s = jnp.sum(e, axis=0, keepdims=True)           # (1, T)
        # Exact divide (NOT approx reciprocal): columns must sum to 1.
        sample_ref[...] = e / s

        # ---- RelaxedOneHotCategorical.log_prob(sample), algebraically reduced
        # lp = -(1+1/temp)*sum_C(g) + K*(m + log s) - K*log(sum_C(-log u))
        #      + [log_scale - sum_C(logits)/temp]        <- row-constant, added in wrapper
        sum_g = jnp.sum(g, axis=0, keepdims=True)       # (1, T)
        sum_nlu = jnp.sum(nlu, axis=0, keepdims=True)   # (1, T)
        lp_ref[...] = (
            -(1.0 + inv_temp) * sum_g
            + kf * (m + jnp.log(s))
            - kf * jnp.log(sum_nlu)
        )

    return concrete_kernel


def concrete_layer_forward(probs_param, uniforms_cn, temp, batch_size, num_obs,
                           lane_dense_sample=False):
    """probs_param: (C,) trainable param; uniforms_cn: (C, >=B*O) U(0,1) noise in the
    lane-dense layout (ideally already at the padded width from _choose_tiling).
    Returns (sample (B, O, C), logLik (B,)) matching the PyTorch module, or the
    lane-dense (C, B*O) sample if lane_dense_sample=True."""
    C, W = uniforms_cn.shape
    N = batch_size * num_obs
    assert W >= N
    temp = float(temp)
    inv_temp = 1.0 / temp
    log_scale = math.lgamma(C) + (C - 1) * math.log(temp)

    tile_n, n_pad = _choose_tiling(N)
    if W < n_pad:
        # Fallback only -- callers should draw noise at width n_pad to skip this pass.
        u = jnp.pad(uniforms_cn.astype(jnp.float32), ((0, 0), (0, n_pad - W)),
                    constant_values=0.5)
    else:
        u = uniforms_cn[:, :n_pad].astype(jnp.float32)

    # PyTorch: probs = softmax(self.probs); Categorical logits = log(probs)
    logits = jax.nn.log_softmax(probs_param.astype(jnp.float32))        # (C,)
    sum_logits = jnp.sum(logits)                                        # runtime scalar
    logits_tile = jnp.broadcast_to(logits[:, None], (C, tile_n))        # full-lane resident

    kernel = make_concrete_kernel(temp, C)
    sample_cn, lp_var = pl.pallas_call(
        kernel,
        out_shape=(
            jax.ShapeDtypeStruct((C, n_pad), jnp.float32),
            jax.ShapeDtypeStruct((1, n_pad), jnp.float32),
        ),
        grid=(n_pad // tile_n,),
        in_specs=[
            pl.BlockSpec((C, tile_n), lambda i: (0, 0)),   # logits: fetched once, resident
            pl.BlockSpec((C, tile_n), lambda i: (0, i)),   # noise tile (pipelined)
        ],
        out_specs=(
            pl.BlockSpec((C, tile_n), lambda i: (0, i)),   # sample tile (lane-dense)
            pl.BlockSpec((1, tile_n), lambda i: (0, i)),   # lane-dense log-prob slab
        ),
        compiler_params=pltpu.CompilerParams(
            dimension_semantics=("parallel",),
        ),
    )(logits_tile, u)

    # Finalize: add the row-constant log_prob term and reduce over obs (tiny).
    const = log_scale - inv_temp * sum_logits
    lp = lp_var[0, :N] + const                              # per-(b, o) log_prob
    loglik = lp.reshape(batch_size, num_obs).sum(axis=1)    # (B,)

    if lane_dense_sample:
        return sample_cn[:, :N], loglik

    # Module contract is (B, O, C).  NOTE: this transpose is a full O(B*O*C) HBM pass
    # in XLA; consumers that accept the lane-dense (C, B*O) layout should use
    # lane_dense_sample=True.  Not done in-kernel: C=16 < 128 lanes would force
    # masked partial stores.
    sample = sample_cn[:, :N].T.reshape(batch_size, num_obs, C)
    return sample, loglik


def _reference(probs_param, uniforms_cn, temp, batch_size, num_obs):
    """Pure-JAX, PyTorch-faithful reference (validation only)."""
    C = probs_param.shape[0]
    logits = jax.nn.log_softmax(probs_param.astype(jnp.float32))
    u = uniforms_cn.T.reshape(batch_size, num_obs, C)
    eps = float(jnp.finfo(jnp.float32).eps)
    u = jnp.clip(u, eps, 1.0 - eps)
    g = -jnp.log(-jnp.log(u))
    scores = (logits + g) / temp
    log_y = jax.nn.log_softmax(scores, axis=-1)
    sample = jnp.exp(log_y)
    log_scale = math.lgamma(C) + (C - 1) * math.log(temp)
    score2 = logits - temp * log_y
    lse2 = jax.scipy.special.logsumexp(score2, axis=-1, keepdims=True)
    base = jnp.sum(score2 - lse2, axis=-1) + log_scale
    lp = base - jnp.sum(log_y, axis=-1)
    return sample, jnp.sum(lp, axis=1)


if __name__ == "__main__":
    batch_size, num_obs, num_cats, temp = 4, 8, 16, 0.5
    N = batch_size * num_obs

    key = jax.random.PRNGKey(0)
    k_param, k_noise = jax.random.split(key)

    # nn.init.uniform_(torch.empty((1, num_cats)), 0.0, 1.0).squeeze(0)
    probs_param = jax.random.uniform(
        k_param, (num_cats,), minval=0.0, maxval=1.0, dtype=jnp.float32
    )
    # Reparameterization noise (torch.rand inside rsample), drawn directly in the
    # lane-dense (C, n_pad) layout the kernel consumes -> no jnp.pad pre-pass.
    _, n_pad = _choose_tiling(N)
    uniforms_cn = jax.random.uniform(
        k_noise, (num_cats, n_pad), dtype=jnp.float32
    )

    sample, loglik = concrete_layer_forward(
        probs_param, uniforms_cn, temp, batch_size, num_obs
    )
    jax.block_until_ready((sample, loglik))

    assert sample.shape == (batch_size, num_obs, num_cats)
    assert loglik.shape == (batch_size,)
    # Exact in-kernel divide -> rows lie on the simplex to f32 rounding.
    assert bool(jnp.all(jnp.abs(jnp.sum(sample, axis=-1) - 1.0) < 1e-5))

    ref_sample, ref_loglik = _reference(
        probs_param, uniforms_cn[:, :N], temp, batch_size, num_obs
    )
    assert bool(jnp.allclose(sample, ref_sample, atol=1e-4, rtol=1e-4))
    assert bool(jnp.allclose(loglik, ref_loglik, atol=5e-2, rtol=5e-4))

    print("KERNEL_OK")
</pallas_src>

<mosaic_0001>
module attributes {stable_mosaic.version = 11 : i64} {
  func.func @concrete_kernel(%arg0: i32, %arg1: memref<16x128xf32, #tpu.memory_space<vmem>>, %arg2: memref<16x128xf32, #tpu.memory_space<vmem>>, %arg3: memref<16x128xf32, #tpu.memory_space<vmem>>, %arg4: memref<1x128xf32, #tpu.memory_space<vmem>>) attributes {dimension_semantics = [#tpu.dimension_semantics<parallel>], iteration_bounds = array<i64: 1>, scalar_prefetch = 0 : i64, scratch_operands = 0 : i64, tpu.core_type = #tpu.core_type<tc>, window_params = [{pipeline_mode = #tpu.pipeline_mode<synchronous>, transform_indices = @transform_0, window_bounds = array<i64: 16, 128>}, {transform_indices = @transform_1, window_bounds = array<i64: 16, 128>}, {transform_indices = @transform_2, window_bounds = array<i64: 16, 128>}, {transform_indices = @transform_3, window_bounds = array<i64: 1, 128>}]} {
    %c0 = arith.constant 0 : index
    %c0_0 = arith.constant 0 : index
    %0 = vector.load %arg1[%c0, %c0_0] : memref<16x128xf32, #tpu.memory_space<vmem>>, vector<16x128xf32>
    %c0_1 = arith.constant 0 : index
    %c0_2 = arith.constant 0 : index
    %1 = vector.load %arg2[%c0_1, %c0_2] : memref<16x128xf32, #tpu.memory_space<vmem>>, vector<16x128xf32>
    %cst = arith.constant 1.1920929E-7 : f32
    %cst_3 = arith.constant 0.99999988 : f32
    %2 = vector.broadcast %cst : f32 to vector<16x128xf32>
    %3 = arith.maximumf %2, %1 : vector<16x128xf32>
    %4 = vector.broadcast %cst_3 : f32 to vector<16x128xf32>
    %5 = arith.minimumf %4, %3 : vector<16x128xf32>
    %6 = math.log %5 : vector<16x128xf32>
    %cst_4 = arith.constant 0.000000e+00 : f32
    %7 = vector.broadcast %cst_4 : f32 to vector<16x128xf32>
    %8 = arith.subf %7, %6 : vector<16x128xf32>
    %9 = math.log %8 : vector<16x128xf32>
    %cst_5 = arith.constant 0.000000e+00 : f32
    %10 = vector.broadcast %cst_5 : f32 to vector<16x128xf32>
    %11 = arith.subf %10, %9 : vector<16x128xf32>
    %12 = arith.addf %0, %11 : vector<16x128xf32>
    %cst_6 = arith.constant 2.000000e+00 : f32
    %13 = vector.broadcast %cst_6 : f32 to vector<16x128xf32>
    %14 = arith.mulf %12, %13 : vector<16x128xf32>
    %cst_7 = arith.constant dense<0xFF800000> : vector<128xf32>
    %15 = vector.multi_reduction <maximumf>, %14, %cst_7 [0] : vector<16x128xf32> to vector<128xf32>
    %16 = vector.shape_cast %15 : vector<128xf32> to vector<1x128xf32>
    %17 = vector.broadcast %16 : vector<1x128xf32> to vector<16x128xf32>
    %18 = arith.subf %14, %17 : vector<16x128xf32>
    %19 = math.exp %18 : vector<16x128xf32>
    %cst_8 = arith.constant dense<0.000000e+00> : vector<128xf32>
    %20 = vector.multi_reduction <add>, %19, %cst_8 [0] : vector<16x128xf32> to vector<128xf32>
    %21 = vector.shape_cast %20 : vector<128xf32> to vector<1x128xf32>
    %22 = vector.broadcast %21 : vector<1x128xf32> to vector<16x128xf32>
    %23 = arith.divf %19, %22 : vector<16x128xf32>
    %c0_9 = arith.constant 0 : index
    %c0_10 = arith.constant 0 : index
    %24 = vector.load %arg3[%c0_9, %c0_10] : memref<16x128xf32, #tpu.memory_space<vmem>>, vector<16x128xf32>
    tpu.vector_store %arg3[%c0_9, %c0_10], %23 {strides = array<i32>} : memref<16x128xf32, #tpu.memory_space<vmem>>, vector<16x128xf32>,
    %cst_11 = arith.constant dense<0.000000e+00> : vector<128xf32>
    %25 = vector.multi_reduction <add>, %11, %cst_11 [0] : vector<16x128xf32> to vector<128xf32>
    %26 = vector.shape_cast %25 : vector<128xf32> to vector<1x128xf32>
    %cst_12 = arith.constant dense<0.000000e+00> : vector<128xf32>
    %27 = vector.multi_reduction <add>, %8, %cst_12 [0] : vector<16x128xf32> to vector<128xf32>
    %28 = vector.shape_cast %27 : vector<128xf32> to vector<1x128xf32>
    %cst_13 = arith.constant -3.000000e+00 : f32
    %29 = vector.broadcast %cst_13 : f32 to vector<1x128xf32>
    %30 = arith.mulf %29, %26 : vector<1x128xf32>
    %31 = math.log %21 : vector<1x128xf32>
    %32 = arith.addf %16, %31 : vector<1x128xf32>
    %cst_14 = arith.constant 1.600000e+01 : f32
    %33 = vector.broadcast %cst_14 : f32 to vector<1x128xf32>
    %34 = arith.mulf %33, %32 : vector<1x128xf32>
    %35 = arith.addf %30, %34 : vector<1x128xf32>
    %36 = math.log %28 : vector<1x128xf32>
    %cst_15 = arith.constant 1.600000e+01 : f32
    %37 = vector.broadcast %cst_15 : f32 to vector<1x128xf32>
    %38 = arith.mulf %37, %36 : vector<1x128xf32>
    %39 = arith.subf %35, %38 : vector<1x128xf32>
    %c0_16 = arith.constant 0 : index
    %c0_17 = arith.constant 0 : index
    %40 = vector.load %arg4[%c0_16, %c0_17] : memref<1x128xf32, #tpu.memory_space<vmem>>, vector<1x128xf32>
    tpu.vector_store %arg4[%c0_16, %c0_17], %39 {strides = array<i32>} : memref<1x128xf32, #tpu.memory_space<vmem>>, vector<1x128xf32>,
    return
  }
  func.func @transform_0(%arg0: i32) -> (i32, i32) {
    %c0_i32 = arith.constant 0 : i32
    %c0_i32_0 = arith.constant 0 : i32
    %c0_i32_1 = arith.constant 0 : i32
    return %c0_i32, %c0_i32_0 : i32, i32
  }
  func.func @transform_1(%arg0: i32) -> (i32, i32) {
    %c0_i32 = arith.constant 0 : i32
    %c0_i32_0 = arith.constant 0 : i32
    return %c0_i32, %arg0 : i32, i32
  }
  func.func @transform_2(%arg0: i32) -> (i32, i32) {
    %c0_i32 = arith.constant 0 : i32
    %c0_i32_0 = arith.constant 0 : i32
    return %c0_i32, %arg0 : i32, i32
  }
  func.func @transform_3(%arg0: i32) -> (i32, i32) {
    %c0_i32 = arith.constant 0 : i32
    %c0_i32_0 = arith.constant 0 : i32
    return %c0_i32, %arg0 : i32, i32
  }
}

</mosaic_0001>

<llo_original>
// kernel: tpu_custom_call.1
$region0: #{tpu_custom_call.1}
  #allocation0 [shape = 'u32[]', space=smem, size = 0x4, offset = 0x4, fixed_abs, tag = 'smem constant byte address 0x4 - core index']
  #allocation1 [shape = 'u32[144,128]{1,0:T(1,128)}', space=vmem, size = 0x12000, scoped, tag = 'internal scratch']
  %s0 = inlined_call_operand.hbm [shape: f32[16,128], index: 0, kind: input, shape index: {}]
  %s1 = inlined_call_operand.hbm [shape: f32[16,128], index: 1, kind: input, shape index: {}]
  %s2 = inlined_call_operand.hbm [shape: f32[16,128], index: 2, kind: output, shape index: {0}]
  %s3 = inlined_call_operand.hbm [shape: f32[1,128], index: 3, kind: output, shape index: {1}]
  %4 = xla_tuple %s2, %s3
  %s5 = sld [smem:[#allocation0]]
  $region34: #{tpu_custom_call.1} parent=0
    _
  %s7 = ssub.s32 1, %s5
  %s8 = scalar_select 0, %s7, %s5
  $region1: #{tpu_custom_call.1} parent=0
    #allocation2 [shape = 'u8[8192]{0}', space=vmem, size = 0x2000, scoped, tag = 'input window, operand 0, single buffered']
    #allocation3 [shape = 's32[1]{0}', space=sflag, size = 0x4, scoped, tag = 'scoped memory for tpu_custom_call.1']
    #allocation4 [shape = 's32[1]{0}', space=sflag, size = 0x4, scoped, tag = 'scoped memory for tpu_custom_call.1']
    #allocation5 [shape = 'u8[8192]{0}', space=vmem, size = 0x2000, scoped, tag = 'input window, operand 1, single buffered']
    #allocation6 [shape = 's32[1]{0}', space=sflag, size = 0x4, scoped, tag = 'scoped memory for tpu_custom_call.1']
    #allocation7 [shape = 'u8[8192]{0}', space=vmem, size = 0x2000, scoped, tag = 'output window, operand 0, single buffered']
    #allocation8 [shape = 'u8[512]{0}', space=vmem, size = 0x400, scoped, tag = 'output window, operand 1, single buffered']
    #allocation9 [shape = 's32[1]{0}', space=sflag, size = 0x4, scoped, tag = 'scoped memory for tpu_custom_call.1']
    %9 = vsyncpa [#allocation3], 0
    %10 = vsyncpa [#allocation6], 0
    %11 = vsyncpa [#allocation4], 0
    %12 = vsyncpa [#allocation9], 0
    // Predicated region
    $region2: #{tpu_custom_call.1} parent=1 // pred_check
      _
    $region3: #{tpu_custom_call.1} parent=1 // pred_check_branch
      %14 = sbr.rel (0) target = $region5
    $region4: #{tpu_custom_call.1} parent=1 // pred_region
      %s16 = ssub.s32 256, 256
      %17 = vsyncadd [#allocation3], %s16
      %s18 = sshll.u32 [#allocation2], 4
      %s19 = int_to_ptr.vmem [resolvable:$true] %s18
      %24 = dma.hbm_to_vmem [thread:$0]  %s0, 256, %s19, [#allocation3], 128, 128, 8
    $region5: #{tpu_custom_call.1} parent=1 // pred_fallthru
      _
    // Predicated region
    $region6: #{tpu_custom_call.1} parent=1 // pred_check
      _
    $region7: #{tpu_custom_call.1} parent=1 // pred_check_branch
      %26 = sbr.rel (0) target = $region9
    $region8: #{tpu_custom_call.1} parent=1 // pred_region
      %s28 = ssub.s32 256, 256
      %29 = vsyncadd [#allocation6], %s28
      %s30 = sshll.u32 [#allocation5], 4
      %s31 = int_to_ptr.vmem [resolvable:$true] %s30
      %36 = dma.hbm_to_vmem [thread:$0]  %s1, 256, %s31, [#allocation6], 128, 128, 8
    $region9: #{tpu_custom_call.1} parent=1 // pred_fallthru
      _
    // Predicated region
    $region10: #{tpu_custom_call.1} parent=1 // pred_check
      _
    $region11: #{tpu_custom_call.1} parent=1 // pred_check_branch
      %38 = sbr.rel (0) target = $region13
    $region12: #{tpu_custom_call.1} parent=1 // pred_region
      %39 = dma.done [#allocation3], 256
    $region13: #{tpu_custom_call.1} parent=1 // pred_fallthru
      _
    // Predicated region
    $region14: #{tpu_custom_call.1} parent=1 // pred_check
      _
    $region15: #{tpu_custom_call.1} parent=1 // pred_check_branch
      %41 = sbr.rel (0) target = $region17
    $region16: #{tpu_custom_call.1} parent=1 // pred_region
      %42 = dma.done [#allocation6], 256
    $region17: #{tpu_custom_call.1} parent=1 // pred_fallthru
      _
    %v43 = vld [vmem:[#allocation2] sm:$0xff]
    %v44 = vld [vmem:[#allocation2 + $0x8] sm:$0xff]
    %v45 = vld [vmem:[#allocation5] sm:$0xff]
    %v46 = vld [vmem:[#allocation5 + $0x8] sm:$0xff]
    %v47 = vmax.f32 %v45, 1.1920929e-07
    %v48 = vmax.f32 %v46, 1.1920929e-07
    %v49 = vmin.f32 %v47, 0.9999999
    %v50 = vmin.f32 %v48, 0.9999999
    %v51 = vlog2.pop %v49
    %v52 = vmul.f32 %v51, 0.6931472
    %v53 = vlog2.pop %v50
    %v54 = vmul.f32 %v53, 0.6931472
    %v55 = vsub.f32 0.0, %v52
    %v56 = vsub.f32 0.0, %v54
    %v57 = vlog2.pop %v55
    %v58 = vmul.f32 %v57, 0.6931472
    %v59 = vlog2.pop %v56
    %v60 = vmul.f32 %v59, 0.6931472
    %v61 = vsub.f32 0.0, %v58
    %v62 = vsub.f32 0.0, %v60
    %v63 = vadd.f32 %v43, %v61
    %v64 = vadd.f32 %v44, %v62
    %v65 = vmul.f32 %v63, 2.0
    %v66 = vmul.f32 %v64, 2.0
    %v67 = vmax.f32 %v65, %v66
    %v68 = vrot.slane %v67, 4
    %v69 = vmax.f32 %v67, %v68
    %v70 = vrot.slane %v69, 2
    %v71 = vmax.f32 %v69, %v70
    %v72 = vrot.slane %v71, 1
    %v73 = vmax.f32 %v71, %v72
    %v74 = vsub.f32 %v65, %v73
    %v75 = vsub.f32 %v66, %v73
    %v76 = vmul.f32 %v74, 1.442695
    %v77 = vpow.pop %v76
    %v78 = vmul.f32 %v75, 1.442695
    %v79 = vpow.pop %v78
    %v80 = vadd.f32 %v77, %v79
    %v81 = vrot.slane %v80, 4
    %v82 = vadd.f32 %v80, %v81
    %v83 = vrot.slane %v82, 2
    %v84 = vadd.f32 %v82, %v83
    %v85 = vrot.slane %v84, 1
    %v86 = vadd.f32 %v84, %v85
    %v87 = vrcp.pop %v86
    %v88 = vmul.f32 %v77, %v87
    %v89 = vmul.f32 %v79, %v87
    %90 = vst [vmem:[#allocation7] sm:$0xff] %v88
    %91 = vst [vmem:[#allocation7 + $0x8] sm:$0xff] %v89
    %v92 = vadd.f32 %v61, %v62
    %v93 = vrot.slane %v92, 4
    %v94 = vadd.f32 %v92, %v93
    %v95 = vrot.slane %v94, 2
    %v96 = vadd.f32 %v94, %v95
    %v97 = vrot.slane %v96, 1
    %v98 = vadd.f32 %v96, %v97
    %v99 = vadd.f32 %v55, %v56
    %v100 = vrot.slane %v99, 4
    %v101 = vadd.f32 %v99, %v100
    %v102 = vrot.slane %v101, 2
    %v103 = vadd.f32 %v101, %v102
    %v104 = vrot.slane %v103, 1
    %v105 = vadd.f32 %v103, %v104
    %v106 = vmul.f32 %v98, -3.0
    %v107 = vlog2.pop %v86
    %v108 = vmul.f32 %v107, 0.6931472
    %v109 = vadd.f32 %v73, %v108
    %v110 = vmul.f32 %v109, 16.0
    %v111 = vadd.f32 %v106, %v110
    %v112 = vlog2.pop %v105
    %v113 = vmul.f32 %v112, 0.6931472
    %v114 = vmul.f32 %v113, 16.0
    %v115 = vsub.f32 %v111, %v114
    %116 = vst [vmem:[#allocation8] sm:$0x1] %v115
    // Predicated region
    $region18: #{tpu_custom_call.1} parent=1 // pred_check
      _
    $region19: #{tpu_custom_call.1} parent=1 // pred_check_branch
      %118 = sbr.rel (0) target = $region21
    $region20: #{tpu_custom_call.1} parent=1 // pred_region
      %s120 = ssub.s32 256, 256
      %121 = vsyncadd [#allocation4], %s120
      %s122 = sshll.u32 [#allocation7], 4
      %s123 = int_to_ptr.vmem [resolvable:$true] %s122
      %128 = dma.vmem_to_hbm [thread:$0]  %s123, 256, %s2, [#allocation4], 128, 128, 8
    $region21: #{tpu_custom_call.1} parent=1 // pred_fallthru
      _
    // Predicated region
    $region22: #{tpu_custom_call.1} parent=1 // pred_check
      _
    $region23: #{tpu_custom_call.1} parent=1 // pred_check_branch
      %130 = sbr.rel (0) target = $region25
    $region24: #{tpu_custom_call.1} parent=1 // pred_region
      %s132 = ssub.s32 16, 16
      %133 = vsyncadd [#allocation9], %s132
      %s135 = sshll.u32 [#allocation8], 4
      %s136 = int_to_ptr.vmem [resolvable:$true] %s135
      %138 = dma.vmem_to_hbm [thread:$0]  %s136, 16, %s3, [#allocation9]
    $region25: #{tpu_custom_call.1} parent=1 // pred_fallthru
      _
    // Predicated region
    $region26: #{tpu_custom_call.1} parent=1 // pred_check
      _
    $region27: #{tpu_custom_call.1} parent=1 // pred_check_branch
      %140 = sbr.rel (0) target = $region29
    $region28: #{tpu_custom_call.1} parent=1 // pred_region
      %141 = dma.done [#allocation4], 256
    $region29: #{tpu_custom_call.1} parent=1 // pred_fallthru
      _
    // Predicated region
    $region30: #{tpu_custom_call.1} parent=1 // pred_check
      _
    $region31: #{tpu_custom_call.1} parent=1 // pred_check_branch
      %143 = sbr.rel (0) target = $region33
    $region32: #{tpu_custom_call.1} parent=1 // pred_region
      %144 = dma.done [#allocation9], 16
    $region33: #{tpu_custom_call.1} parent=1 // pred_fallthru
      _
    %145 = vsyncpa [#allocation3], 1
    %146 = vsyncpa [#allocation6], 1
    %147 = vsyncpa [#allocation4], 1
    %148 = vsyncpa [#allocation9], 1

</llo_original>
